<compile_context>
chip_gen: v5e
topology: v5e:2x2
jax: 0.10.0
libtpu: 0.0.40
codegen_flags: <defaults>
</compile_context>

<pallas_src>
import functools

import jax
import jax.numpy as jnp
from jax.experimental import pallas as pl
from jax.experimental.pallas import tpu as pltpu

EPS = 1e-5  # BatchNorm1d default eps


# ---------------------------------------------------------------------------
# Per-generation budgets (VMEM: 128 MiB on v5e/v6e, 64 MiB per core on v7x).
# ---------------------------------------------------------------------------
def _budgets():
    try:
        cap = int(pltpu.get_tpu_info().vmem_capacity_bytes)
    except Exception:  # query unavailable -> v7x-safe defaults
        cap = 64 * 1024 * 1024
    if cap >= 96 * 1024 * 1024:  # v5e / v6e
        return dict(tile_bytes=4 * 1024 * 1024, vmem_limit=64 * 1024 * 1024,
                    lane_target=1024, fused_bytes=4 * 1024 * 1024)
    # v7x (or unknown): smaller VMEM, much higher HBM bandwidth.
    return dict(tile_bytes=2 * 1024 * 1024, vmem_limit=40 * 1024 * 1024,
                lane_target=512, fused_bytes=2 * 1024 * 1024)


# ---------------------------------------------------------------------------
# Kernels
# ---------------------------------------------------------------------------
def _make_stats_kernel(acc_w):
    """Accumulate lane-resident per-channel sum / sum-of-squares partials.

    x_ref           : (Nt, C, Wt) f32 interleaved tile.
    sum_ref, sq_ref : (1, C, acc_w) f32 accumulator row for this N-tile,
                      resident across the inner ("arbitrary") lane-tile axis.
    Only whole-vreg VALU adds; the cross-lane + parity reduce is done in glue.
    """
    def kernel(x_ref, sum_ref, sq_ref):
        @pl.when(pl.program_id(1) == 0)          # fresh accumulator row per N-tile
        def _init():
            sum_ref[...] = jnp.zeros_like(sum_ref)
            sq_ref[...] = jnp.zeros_like(sq_ref)

        wt = x_ref.shape[2]
        s = jnp.zeros(sum_ref.shape, jnp.float32)
        q = jnp.zeros(sq_ref.shape, jnp.float32)
        for j in range(wt // acc_w):             # static, 128-aligned lane chunks
            chunk = x_ref[:, :, j * acc_w:(j + 1) * acc_w]       # (Nt, C, acc_w)
            s = s + jnp.sum(chunk, axis=0, keepdims=True)        # leading-dim adds
            q = q + jnp.sum(chunk * chunk, axis=0, keepdims=True)
        sum_ref[...] += s
        sq_ref[...] += q
    return kernel


def _normalize_kernel(x_ref, scale_ref, shift_ref, o_ref):
    """out = x * scale + shift (interleaved re/im pattern baked into scale/shift)."""
    o_ref[...] = x_ref[...] * scale_ref[...] + shift_ref[...]


def _make_fused_kernel(inv_count):
    """Single-kernel path for inputs resident in VMEM: stats + normalize."""
    def kernel(x_ref, mask_ref, gr_ref, br_ref, gi_ref, bi_ref, o_ref):
        x = x_ref[...]                           # (N, C, W) interleaved f32
        mask = mask_ref[...]                     # (1, 1, W): 1.0 on real (even) lanes
        xx = x * x
        sum_r = jnp.sum(x * mask, axis=(0, 2), keepdims=True)    # (1, C, 1)
        sum_t = jnp.sum(x, axis=(0, 2), keepdims=True)
        sq_r = jnp.sum(xx * mask, axis=(0, 2), keepdims=True)
        sq_t = jnp.sum(xx, axis=(0, 2), keepdims=True)

        def fold(s, q, g_ref, b_ref):
            mean = s * inv_count
            var = jnp.maximum(q * inv_count - mean * mean, 0.0)
            scale = jax.lax.rsqrt(var + EPS) * g_ref[...]
            return scale, b_ref[...] - mean * scale               # (1, C, 1)

        sc_r, sh_r = fold(sum_r, sq_r, gr_ref, br_ref)
        sc_i, sh_i = fold(sum_t - sum_r, sq_t - sq_r, gi_ref, bi_ref)
        scale = sc_r * mask + sc_i * (1.0 - mask)                 # (1, C, W)
        shift = sh_r * mask + sh_i * (1.0 - mask)
        o_ref[...] = x * scale + shift
    return kernel


# ---------------------------------------------------------------------------
# Tile selection (shapes are static under jit)
# ---------------------------------------------------------------------------
def _pick_lane_tile(w, target):
    """Largest lane tile satisfying the (8,128) rule: a multiple of 128 that
    divides w, or the full width.  Returns 0 if w needs padding first."""
    if w <= target:
        return w
    t = (target // 128) * 128
    while t >= 128:
        if w % t == 0:
            return t
        t -= 128
    return 0


def _pick_n_tile(n, c, wt, budget):
    """Largest divisor of n keeping an (nt, c, wt) f32 tile under budget,
    capped at n//2 so the leading 'parallel' axis has >=2 tiles (v7x megacore)."""
    cap = max(1, budget // (c * wt * 4))
    if n > 1:
        cap = min(cap, n // 2)
    cap = max(1, min(cap, n))
    for d in range(cap, 0, -1):
        if n % d == 0:
            return d
    return 1


# ---------------------------------------------------------------------------
# Two-pass (stats + normalize) path
# ---------------------------------------------------------------------------
def _two_pass(x_il, gamma, beta, n, c, l, bud):
    """x_il: (N, C, 2L) interleaved f32.  gamma/beta: (C, 2) f32 ([:,0]=re, [:,1]=im)."""
    w = x_il.shape[2]
    # TODO(synk): channels are never tiled; extremely large C could exceed VMEM.
    max_wt_c = max(128, ((bud["tile_bytes"] // (c * 4)) // 128) * 128)
    target = min(bud["lane_target"], max_wt_c)
    wt = _pick_lane_tile(w, target)
    if wt == 0:  # large, non-multiple-of-128 width: pad (zeros don't bias the sums)
        w_pad = ((w + 127) // 128) * 128
        x_il = jnp.pad(x_il, ((0, 0), (0, 0), (0, w_pad - w)))
        w = w_pad
        wt = _pick_lane_tile(w, target)
    acc_w = 128 if wt % 128 == 0 else wt          # acc_w is always even (2L even)
    nt = _pick_n_tile(n, c, wt, bud["tile_bytes"])
    gn, gl = n // nt, w // wt

    x_spec = pl.BlockSpec((nt, c, wt), lambda i, j: (i, 0, j))
    acc_spec = pl.BlockSpec((1, c, acc_w), lambda i, j: (i, 0, 0))

    # ---- Pass 1: lane-resident per-channel partial sums. ----
    sum_acc, sq_acc = pl.pallas_call(
        _make_stats_kernel(acc_w),
        grid=(gn, gl),
        in_specs=[x_spec],
        out_specs=(acc_spec, acc_spec),
        out_shape=(jax.ShapeDtypeStruct((gn, c, acc_w), jnp.float32),) * 2,
        compiler_params=pltpu.CompilerParams(
            dimension_semantics=("parallel", "arbitrary"),
            vmem_limit_bytes=bud["vmem_limit"]),
    )(x_il)

    # ---- Tiny glue: cross-lane + parity reduce, fold into scale/shift. ----
    # Note: var = E[x^2] - mean^2 in f32 (clamped); lane-resident partials help
    # accuracy but pathological |mean| >> std inputs may still lose precision.
    count = jnp.float32(n * l)

    def fold(a):                                   # (gn, c, acc_w) -> (c, 2)
        return jnp.sum(a.reshape(gn, c, acc_w // 2, 2), axis=(0, 2))

    s, q = fold(sum_acc), fold(sq_acc)
    mean = s / count
    var = jnp.maximum(q / count - mean * mean, 0.0)
    scale = jax.lax.rsqrt(var + EPS) * gamma       # (c, 2)
    shift = beta - mean * scale

    def interleave(p):                             # (c, 2) -> (1, c, wt) lane pattern
        return jnp.broadcast_to(p[:, None, :], (c, wt // 2, 2)).reshape(1, c, wt)

    scale_il, shift_il = interleave(scale), interleave(shift)

    # ---- Pass 2: pure whole-vreg mul-add; both axes parallel. ----
    par_spec = pl.BlockSpec((1, c, wt), lambda i, j: (0, 0, 0))
    out_il = pl.pallas_call(
        _normalize_kernel,
        grid=(gn, gl),
        in_specs=[x_spec, par_spec, par_spec],
        out_specs=x_spec,
        out_shape=jax.ShapeDtypeStruct(x_il.shape, jnp.float32),
        input_output_aliases={0: 0},               # x_il is dead afterwards
        compiler_params=pltpu.CompilerParams(
            dimension_semantics=("parallel", "parallel"),
            vmem_limit_bytes=bud["vmem_limit"]),
    )(x_il, scale_il, shift_il)
    return out_il


# ---------------------------------------------------------------------------
# Fused single-kernel path (input + output resident in VMEM)
# ---------------------------------------------------------------------------
def _fused(x_il, gamma, beta, n, c, l, bud):
    w = x_il.shape[2]
    mask = (jnp.arange(w) % 2 == 0).astype(jnp.float32).reshape(1, 1, w)
    gr = gamma[:, 0].reshape(1, c, 1)
    gi = gamma[:, 1].reshape(1, c, 1)
    br = beta[:, 0].reshape(1, c, 1)
    bi = beta[:, 1].reshape(1, c, 1)

    def full(shape):
        return pl.BlockSpec(shape, lambda i: (0, 0, 0))

    return pl.pallas_call(
        _make_fused_kernel(1.0 / float(n * l)),
        grid=(1,),
        in_specs=[full((n, c, w)), full((1, 1, w)),
                  full((1, c, 1)), full((1, c, 1)),
                  full((1, c, 1)), full((1, c, 1))],
        out_specs=full((n, c, w)),
        out_shape=jax.ShapeDtypeStruct((n, c, w), jnp.float32),
        input_output_aliases={0: 0},
        compiler_params=pltpu.CompilerParams(
            dimension_semantics=("arbitrary",),
            vmem_limit_bytes=bud["vmem_limit"]),
    )(x_il, mask, gr, br, gi, bi)


# ---------------------------------------------------------------------------
# Forward wrapper
# ---------------------------------------------------------------------------
@functools.partial(jax.jit, static_argnames=("force_two_pass",))
def naive_complex_batchnorm1d(x, gamma_r, beta_r, gamma_i, beta_i,
                              force_two_pass=False):
    """Training-mode NaiveComplexBatchNorm1d forward.  x: complex64 (N, C, L)."""
    n, c, l = x.shape
    w = 2 * l
    bud = _budgets()

    # One fused XLA pass in: complex64 (N, C, L) -> interleaved f32 (N, C, 2L).
    x_il = jnp.stack([jnp.real(x), jnp.imag(x)], axis=-1).reshape(n, c, w)
    x_il = x_il.astype(jnp.float32)

    gamma = jnp.stack([gamma_r, gamma_i], axis=-1).astype(jnp.float32)  # (C, 2)
    beta = jnp.stack([beta_r, beta_i], axis=-1).astype(jnp.float32)

    if (not force_two_pass) and (n * c * w * 4 <= bud["fused_bytes"]):
        out_il = _fused(x_il, gamma, beta, n, c, l, bud)
    else:
        out_il = _two_pass(x_il, gamma, beta, n, c, l, bud)

    # One fused XLA pass out: de-interleave (drops any padding) + recombine.
    out_r = out_il[..., 0:w:2]
    out_i = out_il[..., 1:w:2]
    # TODO(synk): running_mean / running_var momentum tracking (training-time
    # side effect of BatchNorm1d) and eval-mode statistics are not modeled.
    return jax.lax.complex(out_r, out_i)


# ---------------------------------------------------------------------------
# Pure-JAX reference (training-mode BatchNorm1d on real and imag parts)
# ---------------------------------------------------------------------------
def _reference(x, gamma_r, beta_r, gamma_i, beta_i):
    def bn(v, g, b):
        mean = jnp.mean(v, axis=(0, 2), keepdims=True)
        var = jnp.mean((v - mean) ** 2, axis=(0, 2), keepdims=True)
        return (v - mean) / jnp.sqrt(var + EPS) * g[None, :, None] + b[None, :, None]

    r = bn(jnp.real(x).astype(jnp.float32), gamma_r, beta_r)
    i = bn(jnp.imag(x).astype(jnp.float32), gamma_i, beta_i)
    return jax.lax.complex(r, i)


if __name__ == "__main__":
    key = jax.random.PRNGKey(0)

    def check(n, c, l, force_two_pass):
        kr, ki = jax.random.split(jax.random.fold_in(key, n * 1000 + c * 10 + l))
        x = jax.lax.complex(jax.random.normal(kr, (n, c, l), jnp.float32),
                            jax.random.normal(ki, (n, c, l), jnp.float32))
        gamma_r = 1.0 + 0.1 * jnp.arange(c, dtype=jnp.float32)
        beta_r = 0.05 * jnp.arange(c, dtype=jnp.float32)
        gamma_i = 1.0 - 0.05 * jnp.arange(c, dtype=jnp.float32)
        beta_i = -0.02 * jnp.arange(c, dtype=jnp.float32)

        out = naive_complex_batchnorm1d(x, gamma_r, beta_r, gamma_i, beta_i,
                                        force_two_pass=force_two_pass)
        out = jax.block_until_ready(out)
        ref = _reference(x, gamma_r, beta_r, gamma_i, beta_i)
        assert out.shape == (n, c, l) and out.dtype == jnp.complex64
        err = jnp.max(jnp.abs(out - ref))
        assert err < 1e-4, (n, c, l, force_two_pass, float(err))

    # Small shape: fused single-kernel path, then the forced two-pass path.
    check(2, 4, 16, force_two_pass=False)
    check(2, 4, 16, force_two_pass=True)
    # Larger shape exercising 128-lane chunked accumulation (2L = 512, 2 N-tiles).
    check(4, 8, 256, force_two_pass=True)

    print("KERNEL_OK")
</pallas_src>

<mosaic_0001>
module attributes {stable_mosaic.version = 11 : i64} {
  func.func @kernel(%arg0: i32, %arg1: memref<2x4x32xf32, #tpu.memory_space<vmem>>, %arg2: memref<1x1x32xf32, #tpu.memory_space<vmem>>, %arg3: memref<1x4x1xf32, #tpu.memory_space<vmem>>, %arg4: memref<1x4x1xf32, #tpu.memory_space<vmem>>, %arg5: memref<1x4x1xf32, #tpu.memory_space<vmem>>, %arg6: memref<1x4x1xf32, #tpu.memory_space<vmem>>, %arg7: memref<2x4x32xf32, #tpu.memory_space<vmem>>) attributes {dimension_semantics = [#tpu.dimension_semantics<arbitrary>], iteration_bounds = array<i64: 1>, scalar_prefetch = 0 : i64, scratch_operands = 0 : i64, tpu.core_type = #tpu.core_type<tc>, window_params = [{pipeline_mode = #tpu.pipeline_mode<synchronous>, transform_indices = @transform_0, window_bounds = array<i64: 2, 4, 32>}, {pipeline_mode = #tpu.pipeline_mode<synchronous>, transform_indices = @transform_1, window_bounds = array<i64: 1, 1, 32>}, {pipeline_mode = #tpu.pipeline_mode<synchronous>, transform_indices = @transform_2, window_bounds = array<i64: 1, 4, 1>}, {pipeline_mode = #tpu.pipeline_mode<synchronous>, transform_indices = @transform_3, window_bounds = array<i64: 1, 4, 1>}, {pipeline_mode = #tpu.pipeline_mode<synchronous>, transform_indices = @transform_4, window_bounds = array<i64: 1, 4, 1>}, {pipeline_mode = #tpu.pipeline_mode<synchronous>, transform_indices = @transform_5, window_bounds = array<i64: 1, 4, 1>}, {pipeline_mode = #tpu.pipeline_mode<synchronous>, transform_indices = @transform_6, window_bounds = array<i64: 2, 4, 32>}]} {
    %c0 = arith.constant 0 : index
    %c0_0 = arith.constant 0 : index
    %c0_1 = arith.constant 0 : index
    %0 = vector.load %arg1[%c0, %c0_0, %c0_1] : memref<2x4x32xf32, #tpu.memory_space<vmem>>, vector<2x4x32xf32>
    %c0_2 = arith.constant 0 : index
    %c0_3 = arith.constant 0 : index
    %c0_4 = arith.constant 0 : index
    %1 = vector.load %arg2[%c0_2, %c0_3, %c0_4] : memref<1x1x32xf32, #tpu.memory_space<vmem>>, vector<1x1x32xf32>
    %2 = arith.mulf %0, %0 : vector<2x4x32xf32>
    %3 = vector.broadcast %1 : vector<1x1x32xf32> to vector<2x4x32xf32>
    %4 = arith.mulf %0, %3 : vector<2x4x32xf32>
    %cst = arith.constant dense<0.000000e+00> : vector<4xf32>
    %5 = vector.multi_reduction <add>, %4, %cst [0, 2] : vector<2x4x32xf32> to vector<4xf32>
    %6 = vector.shape_cast %5 : vector<4xf32> to vector<1x4x1xf32>
    %cst_5 = arith.constant dense<0.000000e+00> : vector<4xf32>
    %7 = vector.multi_reduction <add>, %0, %cst_5 [0, 2] : vector<2x4x32xf32> to vector<4xf32>
    %8 = vector.shape_cast %7 : vector<4xf32> to vector<1x4x1xf32>
    %9 = vector.broadcast %1 : vector<1x1x32xf32> to vector<2x4x32xf32>
    %10 = arith.mulf %2, %9 : vector<2x4x32xf32>
    %cst_6 = arith.constant dense<0.000000e+00> : vector<4xf32>
    %11 = vector.multi_reduction <add>, %10, %cst_6 [0, 2] : vector<2x4x32xf32> to vector<4xf32>
    %12 = vector.shape_cast %11 : vector<4xf32> to vector<1x4x1xf32>
    %cst_7 = arith.constant dense<0.000000e+00> : vector<4xf32>
    %13 = vector.multi_reduction <add>, %2, %cst_7 [0, 2] : vector<2x4x32xf32> to vector<4xf32>
    %14 = vector.shape_cast %13 : vector<4xf32> to vector<1x4x1xf32>
    %cst_8 = arith.constant 3.125000e-02 : f32
    %15 = vector.broadcast %cst_8 : f32 to vector<1x4x1xf32>
    %16 = arith.mulf %6, %15 : vector<1x4x1xf32>
    %cst_9 = arith.constant 3.125000e-02 : f32
    %17 = vector.broadcast %cst_9 : f32 to vector<1x4x1xf32>
    %18 = arith.mulf %12, %17 : vector<1x4x1xf32>
    %19 = arith.mulf %16, %16 : vector<1x4x1xf32>
    %20 = arith.subf %18, %19 : vector<1x4x1xf32>
    %cst_10 = arith.constant 0.000000e+00 : f32
    %21 = vector.broadcast %cst_10 : f32 to vector<1x4x1xf32>
    %22 = arith.maximumf %20, %21 : vector<1x4x1xf32>
    %cst_11 = arith.constant 9.99999974E-6 : f32
    %23 = vector.broadcast %cst_11 : f32 to vector<1x4x1xf32>
    %24 = arith.addf %22, %23 : vector<1x4x1xf32>
    %25 = math.rsqrt %24 : vector<1x4x1xf32>
    %c0_12 = arith.constant 0 : index
    %c0_13 = arith.constant 0 : index
    %c0_14 = arith.constant 0 : index
    %26 = vector.load %arg3[%c0_12, %c0_13, %c0_14] : memref<1x4x1xf32, #tpu.memory_space<vmem>>, vector<1x4x1xf32>
    %27 = arith.mulf %25, %26 : vector<1x4x1xf32>
    %c0_15 = arith.constant 0 : index
    %c0_16 = arith.constant 0 : index
    %c0_17 = arith.constant 0 : index
    %28 = vector.load %arg4[%c0_15, %c0_16, %c0_17] : memref<1x4x1xf32, #tpu.memory_space<vmem>>, vector<1x4x1xf32>
    %29 = arith.mulf %16, %27 : vector<1x4x1xf32>
    %30 = arith.subf %28, %29 : vector<1x4x1xf32>
    %31 = arith.subf %8, %6 : vector<1x4x1xf32>
    %32 = arith.subf %14, %12 : vector<1x4x1xf32>
    %cst_18 = arith.constant 3.125000e-02 : f32
    %33 = vector.broadcast %cst_18 : f32 to vector<1x4x1xf32>
    %34 = arith.mulf %31, %33 : vector<1x4x1xf32>
    %cst_19 = arith.constant 3.125000e-02 : f32
    %35 = vector.broadcast %cst_19 : f32 to vector<1x4x1xf32>
    %36 = arith.mulf %32, %35 : vector<1x4x1xf32>
    %37 = arith.mulf %34, %34 : vector<1x4x1xf32>
    %38 = arith.subf %36, %37 : vector<1x4x1xf32>
    %cst_20 = arith.constant 0.000000e+00 : f32
    %39 = vector.broadcast %cst_20 : f32 to vector<1x4x1xf32>
    %40 = arith.maximumf %38, %39 : vector<1x4x1xf32>
    %cst_21 = arith.constant 9.99999974E-6 : f32
    %41 = vector.broadcast %cst_21 : f32 to vector<1x4x1xf32>
    %42 = arith.addf %40, %41 : vector<1x4x1xf32>
    %43 = math.rsqrt %42 : vector<1x4x1xf32>
    %c0_22 = arith.constant 0 : index
    %c0_23 = arith.constant 0 : index
    %c0_24 = arith.constant 0 : index
    %44 = vector.load %arg5[%c0_22, %c0_23, %c0_24] : memref<1x4x1xf32, #tpu.memory_space<vmem>>, vector<1x4x1xf32>
    %45 = arith.mulf %43, %44 : vector<1x4x1xf32>
    %c0_25 = arith.constant 0 : index
    %c0_26 = arith.constant 0 : index
    %c0_27 = arith.constant 0 : index
    %46 = vector.load %arg6[%c0_25, %c0_26, %c0_27] : memref<1x4x1xf32, #tpu.memory_space<vmem>>, vector<1x4x1xf32>
    %47 = arith.mulf %34, %45 : vector<1x4x1xf32>
    %48 = arith.subf %46, %47 : vector<1x4x1xf32>
    %49 = vector.broadcast %27 : vector<1x4x1xf32> to vector<1x4x32xf32>
    %50 = vector.broadcast %1 : vector<1x1x32xf32> to vector<1x4x32xf32>
    %51 = arith.mulf %49, %50 : vector<1x4x32xf32>
    %cst_28 = arith.constant 1.000000e+00 : f32
    %52 = vector.broadcast %cst_28 : f32 to vector<1x1x32xf32>
    %53 = arith.subf %52, %1 : vector<1x1x32xf32>
    %54 = vector.broadcast %45 : vector<1x4x1xf32> to vector<1x4x32xf32>
    %55 = vector.broadcast %53 : vector<1x1x32xf32> to vector<1x4x32xf32>
    %56 = arith.mulf %54, %55 : vector<1x4x32xf32>
    %57 = arith.addf %51, %56 : vector<1x4x32xf32>
    %58 = vector.broadcast %30 : vector<1x4x1xf32> to vector<1x4x32xf32>
    %59 = vector.broadcast %1 : vector<1x1x32xf32> to vector<1x4x32xf32>
    %60 = arith.mulf %58, %59 : vector<1x4x32xf32>
    %cst_29 = arith.constant 1.000000e+00 : f32
    %61 = vector.broadcast %cst_29 : f32 to vector<1x1x32xf32>
    %62 = arith.subf %61, %1 : vector<1x1x32xf32>
    %63 = vector.broadcast %48 : vector<1x4x1xf32> to vector<1x4x32xf32>
    %64 = vector.broadcast %62 : vector<1x1x32xf32> to vector<1x4x32xf32>
    %65 = arith.mulf %63, %64 : vector<1x4x32xf32>
    %66 = arith.addf %60, %65 : vector<1x4x32xf32>
    %67 = vector.broadcast %57 : vector<1x4x32xf32> to vector<2x4x32xf32>
    %68 = arith.mulf %0, %67 : vector<2x4x32xf32>
    %69 = vector.broadcast %66 : vector<1x4x32xf32> to vector<2x4x32xf32>
    %70 = arith.addf %68, %69 : vector<2x4x32xf32>
    %c0_30 = arith.constant 0 : index
    %c0_31 = arith.constant 0 : index
    %c0_32 = arith.constant 0 : index
    %71 = vector.load %arg7[%c0_30, %c0_31, %c0_32] : memref<2x4x32xf32, #tpu.memory_space<vmem>>, vector<2x4x32xf32>
    tpu.vector_store %arg7[%c0_30, %c0_31, %c0_32], %70 {strides = array<i32>} : memref<2x4x32xf32, #tpu.memory_space<vmem>>, vector<2x4x32xf32>,
    return
  }
  func.func @transform_0(%arg0: i32) -> (i32, i32, i32) {
    %c0_i32 = arith.constant 0 : i32
    %c0_i32_0 = arith.constant 0 : i32
    %c0_i32_1 = arith.constant 0 : i32
    %c0_i32_2 = arith.constant 0 : i32
    return %c0_i32, %c0_i32_0, %c0_i32_1 : i32, i32, i32
  }
  func.func @transform_1(%arg0: i32) -> (i32, i32, i32) {
    %c0_i32 = arith.constant 0 : i32
    %c0_i32_0 = arith.constant 0 : i32
    %c0_i32_1 = arith.constant 0 : i32
    %c0_i32_2 = arith.constant 0 : i32
    return %c0_i32, %c0_i32_0, %c0_i32_1 : i32, i32, i32
  }
  func.func @transform_2(%arg0: i32) -> (i32, i32, i32) {
    %c0_i32 = arith.constant 0 : i32
    %c0_i32_0 = arith.constant 0 : i32
    %c0_i32_1 = arith.constant 0 : i32
    %c0_i32_2 = arith.constant 0 : i32
    return %c0_i32, %c0_i32_0, %c0_i32_1 : i32, i32, i32
  }
  func.func @transform_3(%arg0: i32) -> (i32, i32, i32) {
    %c0_i32 = arith.constant 0 : i32
    %c0_i32_0 = arith.constant 0 : i32
    %c0_i32_1 = arith.constant 0 : i32
    %c0_i32_2 = arith.constant 0 : i32
    return %c0_i32, %c0_i32_0, %c0_i32_1 : i32, i32, i32
  }
  func.func @transform_4(%arg0: i32) -> (i32, i32, i32) {
    %c0_i32 = arith.constant 0 : i32
    %c0_i32_0 = arith.constant 0 : i32
    %c0_i32_1 = arith.constant 0 : i32
    %c0_i32_2 = arith.constant 0 : i32
    return %c0_i32, %c0_i32_0, %c0_i32_1 : i32, i32, i32
  }
  func.func @transform_5(%arg0: i32) -> (i32, i32, i32) {
    %c0_i32 = arith.constant 0 : i32
    %c0_i32_0 = arith.constant 0 : i32
    %c0_i32_1 = arith.constant 0 : i32
    %c0_i32_2 = arith.constant 0 : i32
    return %c0_i32, %c0_i32_0, %c0_i32_1 : i32, i32, i32
  }
  func.func @transform_6(%arg0: i32) -> (i32, i32, i32) {
    %c0_i32 = arith.constant 0 : i32
    %c0_i32_0 = arith.constant 0 : i32
    %c0_i32_1 = arith.constant 0 : i32
    %c0_i32_2 = arith.constant 0 : i32
    return %c0_i32, %c0_i32_0, %c0_i32_1 : i32, i32, i32
  }
}

</mosaic_0001>

<llo_original>
// kernel: custom-call.1
$region0: #{custom-call.1}
  %s0 = inlined_call_operand.hbm [shape: c64[2,4,16], index: 0, kind: input, shape index: {}]
  %s1 = inlined_call_operand.vmem [shape: f32[2,4,16], index: 1, kind: output, shape index: {}]
  %s2 = scalar_lea.hbm %s0, 8
  $region1: #{custom-call.1} parent=0
    #allocation0 [shape = 's32[1]{0}', space=sflag, size = 0x4, scoped, tag = 'scoped memory for custom-call.1']
    %3 = vsyncpa [#allocation0], 0
    %s5 = sshll.u32 %s2, 4
    %s6 = int_to_ptr.hbm [resolvable:$true] %s5
    %s7 = sshll.u32 %s1, 4
    %s8 = int_to_ptr.vmem [resolvable:$true] %s7
    %10 = dma.hbm_to_vmem [thread:$0]  %s6, 128, %s8, [#allocation0]
    %12 = dma.done [#allocation0], 128
    %13 = vsyncpa [#allocation0], 1

// kernel: custom-call
$region0: #{custom-call}
  %s0 = inlined_call_operand.hbm [shape: c64[2,4,16], index: 0, kind: input, shape index: {}]
  %s1 = inlined_call_operand.vmem [shape: f32[2,4,16], index: 1, kind: output, shape index: {}]
  $region1: #{custom-call} parent=0
    #allocation0 [shape = 's32[1]{0}', space=sflag, size = 0x4, scoped, tag = 'scoped memory for custom-call']
    %2 = vsyncpa [#allocation0], 0
    %s4 = sshll.u32 %s0, 4
    %s5 = int_to_ptr.hbm [resolvable:$true] %s4
    %s6 = sshll.u32 %s1, 4
    %s7 = int_to_ptr.vmem [resolvable:$true] %s6
    %9 = dma.hbm_to_vmem [thread:$0]  %s5, 128, %s7, [#allocation0]
    %11 = dma.done [#allocation0], 128
    %12 = vsyncpa [#allocation0], 1

// kernel: custom-call.2
$region0: #{custom-call.2}
  %s0 = inlined_call_operand.vmem [shape: f32[2,4,16], index: 0, kind: input, shape index: {}]
  %s1 = inlined_call_operand.vmem [shape: f32[2,4,16], index: 1, kind: input, shape index: {}]
  %s2 = inlined_call_operand.hbm [shape: c64[2,4,16], index: 2, kind: output, shape index: {}]
  %s3 = scalar_lea.hbm %s2, 8
  $region1: #{custom-call.2} parent=0
    #allocation0 [shape = 's32[1]{0}', space=sflag, size = 0x4, scoped, tag = 'scoped memory for custom-call.2']
    %4 = vsyncpa [#allocation0], 0
    %s6 = sshll.u32 %s0, 4
    %s7 = int_to_ptr.vmem [resolvable:$true] %s6
    %s8 = sshll.u32 %s2, 4
    %s9 = int_to_ptr.hbm [resolvable:$true] %s8
    %11 = dma.vmem_to_hbm [thread:$0]  %s7, 128, %s9, [#allocation0]
    %13 = dma.done [#allocation0], 128
    %14 = vsyncpa [#allocation0], 1
  $region2: #{custom-call.2} parent=0
    #allocation1 [shape = 's32[1]{0}', space=sflag, size = 0x4, scoped, tag = 'scoped memory for custom-call.2']
    %15 = vsyncpa [#allocation1], 0
    %s17 = sshll.u32 %s1, 4
    %s18 = int_to_ptr.vmem [resolvable:$true] %s17
    %s19 = sshll.u32 %s3, 4
    %s20 = int_to_ptr.hbm [resolvable:$true] %s19
    %22 = dma.vmem_to_hbm [thread:$0]  %s18, 128, %s20, [#allocation1]
    %24 = dma.done [#allocation1], 128
    %25 = vsyncpa [#allocation1], 1

// kernel: naive_complex_batchnorm1d.1
$region0: #{naive_complex_batchnorm1d.1}
  #allocation0 [shape = 'u32[]', space=smem, size = 0x4, offset = 0x4, fixed_abs, tag = 'smem constant byte address 0x4 - core index']
  #allocation1 [shape = 'u32[72,128]{1,0:T(1,128)}', space=vmem, size = 0x9000, scoped, tag = 'internal scratch']
  %s0 = inlined_call_operand.vmem [shape: f32[2,4,32], index: 0, kind: input, shape index: {}, may-alias: {0,6}]
  %s1 = inlined_call_operand.vmem [shape: f32[1,1,32], index: 1, kind: input, shape index: {}]
  %s2 = inlined_call_operand.vmem [shape: f32[1,4,1], index: 2, kind: input, shape index: {}]
  %s3 = inlined_call_operand.vmem [shape: f32[1,4,1], index: 3, kind: input, shape index: {}]
  %s4 = inlined_call_operand.vmem [shape: f32[1,4,1], index: 4, kind: input, shape index: {}]
  %s5 = inlined_call_operand.vmem [shape: f32[1,4,1], index: 5, kind: input, shape index: {}]
  %s6 = inlined_call_operand.vmem [shape: f32[2,4,32], index: 6, kind: output, shape index: {}, may-alias: {0,6}]
  %s7 = sld [smem:[#allocation0]]
  $region34: #{naive_complex_batchnorm1d.1} parent=0
    _
  %s9 = ssub.s32 1, %s7
  %s10 = scalar_select 0, %s9, %s7
  // Predicated region
  $region2: #{naive_complex_batchnorm1d.1} parent=0 // pred_check
    _
  $region3: #{naive_complex_batchnorm1d.1} parent=0 // pred_check_branch
    %12 = sbr.rel (0) target = $region5
  $region4: #{naive_complex_batchnorm1d.1} parent=0 // pred_region
    _
  $region5: #{naive_complex_batchnorm1d.1} parent=0 // pred_fallthru
    _
  // Predicated region
  $region6: #{naive_complex_batchnorm1d.1} parent=0 // pred_check
    _
  $region7: #{naive_complex_batchnorm1d.1} parent=0 // pred_check_branch
    %14 = sbr.rel (0) target = $region9
  $region8: #{naive_complex_batchnorm1d.1} parent=0 // pred_region
    _
  $region9: #{naive_complex_batchnorm1d.1} parent=0 // pred_fallthru
    _
  // Predicated region
  $region10: #{naive_complex_batchnorm1d.1} parent=0 // pred_check
    _
  $region11: #{naive_complex_batchnorm1d.1} parent=0 // pred_check_branch
    %16 = sbr.rel (0) target = $region13
  $region12: #{naive_complex_batchnorm1d.1} parent=0 // pred_region
    _
  $region13: #{naive_complex_batchnorm1d.1} parent=0 // pred_fallthru
    _
  // Predicated region
  $region14: #{naive_complex_batchnorm1d.1} parent=0 // pred_check
    _
  $region15: #{naive_complex_batchnorm1d.1} parent=0 // pred_check_branch
    %18 = sbr.rel (0) target = $region17
  $region16: #{naive_complex_batchnorm1d.1} parent=0 // pred_region
    _
  $region17: #{naive_complex_batchnorm1d.1} parent=0 // pred_fallthru
    _
  // Predicated region
  $region18: #{naive_complex_batchnorm1d.1} parent=0 // pred_check
    _
  $region19: #{naive_complex_batchnorm1d.1} parent=0 // pred_check_branch
    %20 = sbr.rel (0) target = $region21
  $region20: #{naive_complex_batchnorm1d.1} parent=0 // pred_region
    _
  $region21: #{naive_complex_batchnorm1d.1} parent=0 // pred_fallthru
    _
  // Predicated region
  $region22: #{naive_complex_batchnorm1d.1} parent=0 // pred_check
    _
  $region23: #{naive_complex_batchnorm1d.1} parent=0 // pred_check_branch
    %22 = sbr.rel (0) target = $region25
  $region24: #{naive_complex_batchnorm1d.1} parent=0 // pred_region
    _
  $region25: #{naive_complex_batchnorm1d.1} parent=0 // pred_fallthru
    _
  %v23 = vld [vmem:[%s0] sm:$0xf]
  %v24 = vld [vmem:[%s0 + $0x4] sm:$0xf]
  %v25 = vld [vmem:[%s1] sm:$0x1]
  %v26 = vmul.f32 %v23, %v23
  %v27 = vmul.f32 %v24, %v24
  %v29 = vperm.slane %v25, 0
  %v31 = vmul.f32 %v23, %v29
  %v32 = vmul.f32 %v24, %v29
  %vm33 = vcmask 257024
  %v34 = vsel %vm33, %v31, 0.0
  %v35 = vsel %vm33, %v32, 0.0
  %v36 = vadd.f32 %v34, %v35
  %37 = vadd.xlane.f32.xlu0 %v36
  %v38 = vpop.xlane.xlu0 %37
  %v39 = vsel %vm33, %v23, 0.0
  %v40 = vsel %vm33, %v24, 0.0
  %v41 = vadd.f32 %v39, %v40
  %42 = vadd.xlane.f32.xlu0 %v41
  %v43 = vpop.xlane.xlu0 %42
  %v44 = vmul.f32 %v26, %v29
  %v45 = vmul.f32 %v27, %v29
  %v46 = vsel %vm33, %v44, 0.0
  %v47 = vsel %vm33, %v45, 0.0
  %v48 = vadd.f32 %v46, %v47
  %49 = vadd.xlane.f32.xlu0 %v48
  %v50 = vpop.xlane.xlu0 %49
  %v51 = vsel %vm33, %v26, 0.0
  %v52 = vsel %vm33, %v27, 0.0
  %v53 = vadd.f32 %v51, %v52
  %54 = vadd.xlane.f32.xlu0 %v53
  %v55 = vpop.xlane.xlu0 %54
  %v56 = vmul.f32 %v38, 0.03125
  %v57 = vmul.f32 %v50, 0.03125
  %v58 = vmul.f32 %v56, %v56
  %v59 = vsub.f32 %v57, %v58
  %v60 = vmax.f32 %v59, 0.0
  %v61 = vadd.f32 %v60, 1e-05
  %v62 = vrsqrt.pop %v61
  %v63 = vmul.f32 %v62, %v61
  %v64 = vmul.f32 %v63, %v62
  %v65 = vmul.f32 0.5, %v64
  %v66 = vsub.f32 1.5, %v65
  %v67 = vmul.f32 %v62, %v66
  %vm68 = vweird.f32 %v61
  %vm69 = vweird.f32 %v62
  %vm70 = vmor %vm68, %vm69
  %v71 = vsel %vm70, %v62, %v67
  %v72 = vld [vmem:[%s2] sm:$0xf]
  %v73 = vmul.f32 %v71, %v72
  %v74 = vld [vmem:[%s3] sm:$0xf]
  %v75 = vmul.f32 %v56, %v73
  %v76 = vsub.f32 %v74, %v75
  %v77 = vsub.f32 %v43, %v38
  %v78 = vsub.f32 %v55, %v50
  %v79 = vmul.f32 %v77, 0.03125
  %v80 = vmul.f32 %v78, 0.03125
  %v81 = vmul.f32 %v79, %v79
  %v82 = vsub.f32 %v80, %v81
  %v83 = vmax.f32 %v82, 0.0
  %v84 = vadd.f32 %v83, 1e-05
  %v85 = vrsqrt.pop %v84
  %v86 = vmul.f32 %v85, %v84
  %v87 = vmul.f32 %v86, %v85
  %v88 = vmul.f32 0.5, %v87
  %v89 = vsub.f32 1.5, %v88
  %v90 = vmul.f32 %v85, %v89
  %vm91 = vweird.f32 %v84
  %vm92 = vweird.f32 %v85
  %vm93 = vmor %vm91, %vm92
  %v94 = vsel %vm93, %v85, %v90
  %v95 = vld [vmem:[%s4] sm:$0xf]
  %v96 = vmul.f32 %v94, %v95
  %v97 = vld [vmem:[%s5] sm:$0xf]
  %v98 = vmul.f32 %v79, %v96
  %v99 = vsub.f32 %v97, %v98
  %101 = vset.pattern.permute.xlu0 0
  %102 = vperm.xlu0 %101, %v73
  %v103 = vpop.permute.xlu0 %102
  %v105 = vmul.f32 %v103, %v29
  %v106 = vsub.f32 1.0, %v25
  %108 = vset.pattern.permute.xlu0 0
  %109 = vperm.xlu0 %108, %v96
  %v110 = vpop.permute.xlu0 %109
  %v113 = vperm.slane %v106, 0
  %v115 = vmul.f32 %v110, %v113
  %v116 = vadd.f32 %v105, %v115
  %118 = vset.pattern.permute.xlu0 0
  %119 = vperm.xlu0 %118, %v76
  %v120 = vpop.permute.xlu0 %119
  %v122 = vmul.f32 %v120, %v29
  %124 = vset.pattern.permute.xlu0 0
  %125 = vperm.xlu0 %124, %v99
  %v126 = vpop.permute.xlu0 %125
  %v128 = vmul.f32 %v126, %v113
  %v129 = vadd.f32 %v122, %v128
  %v130 = vmul.f32 %v23, %v116
  %v131 = vmul.f32 %v24, %v116
  %v132 = vadd.f32 %v130, %v129
  %v133 = vadd.f32 %v131, %v129
  %134 = vst.msk [vmem:[%s6] sm:$0xf] %vm33, %v132
  %135 = vst.msk [vmem:[%s6 + $0x4] sm:$0xf] %vm33, %v133
  // Predicated region
  $region26: #{naive_complex_batchnorm1d.1} parent=0 // pred_check
    _
  $region27: #{naive_complex_batchnorm1d.1} parent=0 // pred_check_branch
    %137 = sbr.rel (0) target = $region29
  $region28: #{naive_complex_batchnorm1d.1} parent=0 // pred_region
    _
  $region29: #{naive_complex_batchnorm1d.1} parent=0 // pred_fallthru
    _
  // Predicated region
  $region30: #{naive_complex_batchnorm1d.1} parent=0 // pred_check
    _
  $region31: #{naive_complex_batchnorm1d.1} parent=0 // pred_check_branch
    %139 = sbr.rel (0) target = $region33
  $region32: #{naive_complex_batchnorm1d.1} parent=0 // pred_region
    _
  $region33: #{naive_complex_batchnorm1d.1} parent=0 // pred_fallthru
    _

</llo_original>
